<compile_context>
chip_gen: v6e
topology: v6e:2x2x1
jax: 0.10.0
libtpu: 0.0.40
codegen_flags: <defaults>
</compile_context>

<pallas_src>
import functools

import jax
import jax.numpy as jnp
from jax.experimental import pallas as pl
from jax.experimental.pallas import tpu as pltpu

_MIB = 1024 * 1024


def _round_up(x, m):
    return ((x + m - 1) // m) * m


@functools.lru_cache(maxsize=None)
def _vmem_limit_bytes():
    """Generation-aware scoped-VMEM cap (~75% of physical VMEM, <=100 MiB):
       v5e/v6e (128 MiB) -> 96 MiB, v7x (64 MiB) -> 48 MiB."""
    try:
        cap = int(pltpu.get_tpu_info().vmem_capacity_bytes)
    except Exception:
        cap = 0
    if cap <= 0:
        cap = 64 * _MIB  # conservative (v7x-sized) fallback
    return min((cap * 3) // 4, 100 * _MIB)


@functools.lru_cache(maxsize=None)
def _buffered_invariants_supported():
    """One-time probe: can loop-invariant operands use pipeline_mode=
    pl.Buffered(1) (single buffer) on this JAX / libtpu build?"""
    if not hasattr(pl, "Buffered"):
        return False
    try:
        def k(x_ref, w_ref, o_ref):
            o_ref[...] = x_ref[...] + w_ref[...]

        fn = pl.pallas_call(
            k,
            out_shape=jax.ShapeDtypeStruct((16, 128), jnp.float32),
            grid=(2,),
            in_specs=[
                pl.BlockSpec((8, 128), lambda i: (i, 0)),
                pl.BlockSpec((8, 128), lambda i: (0, 0),
                             pipeline_mode=pl.Buffered(1)),
            ],
            out_specs=pl.BlockSpec((8, 128), lambda i: (i, 0)),
        )
        x = jax.ShapeDtypeStruct((16, 128), jnp.float32)
        w = jax.ShapeDtypeStruct((8, 128), jnp.float32)
        jax.jit(fn).lower(x, w).compile()
        return True
    except Exception:
        return False


def _pick_row_tile(rows, intermediate, hidden, x_bytes, res_bytes, out_bytes,
                   compute_bytes, weight_bufs, budget_bytes):
    """Largest MXU-friendly row tile whose working set fits the VMEM budget."""
    chosen = 8
    for tile in (1024, 512, 256, 128, 64, 32, 16, 8):
        est = (
            2 * tile * intermediate * x_bytes                 # x tile, 2 bufs (input dtype)
            + 2 * tile * hidden * res_bytes                   # residual tile, 2 bufs
            + 2 * tile * hidden * out_bytes                   # output tile, 2 bufs
            + weight_bufs * intermediate * hidden * compute_bytes  # weight
            + 8 * hidden * 4                                  # bias / gamma / beta
            + tile * intermediate * compute_bytes             # in-kernel x cast temp
            + 3 * tile * hidden * 4                           # f32 h / centered temps
        )
        if est <= budget_bytes:
            chosen = tile
            break
    # Never tile wider than the (8-aligned) number of rows.
    chosen = min(chosen, _round_up(rows, 8))
    # Keep the grid long enough (~4 steps when the problem allows) so a huge
    # auto tile doesn't collapse the "parallel" row axis feeding v7x's 2 TCs.
    max_steps = pl.cdiv(rows, 8)
    target_steps = min(4, max_steps)
    while chosen > 8 and pl.cdiv(rows, chosen) < target_steps:
        chosen = max(8, _round_up(chosen // 2, 8))
    return max(chosen, 8)


def _bert_output_kernel(x_ref, w_ref, b_ref, res_ref, gamma_ref, beta_ref,
                        o_ref, *, eps, compute_dtype):
    # x_ref:    (TM, I)  tile of hidden_states rows (original input dtype)
    # w_ref:    (I, H)   dense weight, already [in, out], compute dtype
    # b_ref:    (1, H)   dense bias
    # res_ref:  (TM, H)  matching residual tile
    # gamma/beta: (1, H) LayerNorm affine params
    # o_ref:    (TM, H)
    # In-kernel operand cast (VPU work hidden under the MXU) instead of a
    # separate wrapper-side astype pass over HBM.
    x = x_ref[...].astype(compute_dtype)
    h = jnp.dot(x, w_ref[...], preferred_element_type=jnp.float32)

    bias = b_ref[...].astype(jnp.float32)
    gamma = gamma_ref[...].astype(jnp.float32)
    beta = beta_ref[...].astype(jnp.float32)

    # dropout: identity at inference time
    h = h + bias + res_ref[...].astype(jnp.float32)

    # Two-pass LayerNorm statistics in f32 (stable; VPU has slack under MXU).
    mean = jnp.mean(h, axis=-1, keepdims=True)
    centered = h - mean
    var = jnp.mean(centered * centered, axis=-1, keepdims=True)

    out = centered * jax.lax.rsqrt(var + eps) * gamma + beta
    o_ref[...] = out.astype(o_ref.dtype)


def bert_output(hidden_states, input_tensor, w, b, gamma, beta, *,
                eps=1e-12, row_tile=None, matmul_dtype=None):
    """hidden_states: [B, S, I], input_tensor: [B, S, H] -> [B, S, H].

    w is the transposed nn.Linear weight, shape [I, H].
    matmul_dtype: MXU operand dtype.  Defaults to bfloat16 when inputs are
    float32 (f32 accumulation + f32 LayerNorm are kept), which is what the
    v6e/v7x MXU wants; pass jnp.float32 to force full-precision operands.
    """
    B, S, I = hidden_states.shape
    H = input_tensor.shape[-1]
    rows = B * S
    out_dtype = input_tensor.dtype

    if matmul_dtype is None:
        compute_dtype = (jnp.dtype(jnp.bfloat16)
                         if hidden_states.dtype == jnp.float32
                         else jnp.dtype(hidden_states.dtype))
    else:
        compute_dtype = jnp.dtype(matmul_dtype)

    x_bytes = jnp.dtype(hidden_states.dtype).itemsize
    res_bytes = jnp.dtype(input_tensor.dtype).itemsize
    out_bytes = jnp.dtype(out_dtype).itemsize
    compute_bytes = compute_dtype.itemsize

    use_buffered_invariants = _buffered_invariants_supported()
    weight_bufs = 1 if use_buffered_invariants else 2

    vmem_limit = _vmem_limit_bytes()
    budget = vmem_limit - 4 * _MIB  # headroom for compiler-internal scratch

    if row_tile is None:
        row_tile = _pick_row_tile(rows, I, H, x_bytes, res_bytes, out_bytes,
                                  compute_bytes, weight_bufs, budget)

    # No wrapper-side jnp.pad / astype: x and the residual go straight into
    # the kernel; the ragged last row block (if any) is handled by Pallas
    # partial-block masking (rows are independent; OOB rows never reach HBM).
    x2 = hidden_states.reshape(rows, I)
    r2 = input_tensor.reshape(rows, H)
    w2 = w.astype(compute_dtype)  # one-time weight cast (loop-invariant)
    b2 = b.reshape(1, H)
    g2 = gamma.reshape(1, H)
    be2 = beta.reshape(1, H)

    grid = (pl.cdiv(rows, row_tile),)
    kernel = functools.partial(_bert_output_kernel, eps=eps,
                               compute_dtype=compute_dtype)

    flops = 2 * rows * I * H
    bytes_accessed = (
        rows * I * x_bytes                # x
        + I * H * compute_bytes           # weight
        + rows * H * res_bytes            # residual
        + rows * H * out_bytes            # output
        + 3 * H * 4                       # bias / gamma / beta
    )
    cost = pl.CostEstimate(flops=flops, transcendentals=0,
                           bytes_accessed=bytes_accessed)

    # Loop-invariant operands (constant index_map): single buffer if supported.
    inv_kwargs = ({"pipeline_mode": pl.Buffered(1)}
                  if use_buffered_invariants else {})
    in_specs = [
        pl.BlockSpec((row_tile, I), lambda i: (i, 0)),            # x tile
        pl.BlockSpec((I, H), lambda i: (0, 0), **inv_kwargs),     # weight
        pl.BlockSpec((1, H), lambda i: (0, 0), **inv_kwargs),     # bias
        pl.BlockSpec((row_tile, H), lambda i: (i, 0)),            # residual
        pl.BlockSpec((1, H), lambda i: (0, 0), **inv_kwargs),     # gamma
        pl.BlockSpec((1, H), lambda i: (0, 0), **inv_kwargs),     # beta
    ]

    out2 = pl.pallas_call(
        kernel,
        out_shape=jax.ShapeDtypeStruct((rows, H), out_dtype),
        grid_spec=pltpu.PrefetchScalarGridSpec(
            num_scalar_prefetch=0,
            grid=grid,
            in_specs=in_specs,
            out_specs=pl.BlockSpec((row_tile, H), lambda i: (i, 0)),
        ),
        compiler_params=pltpu.CompilerParams(
            dimension_semantics=("parallel",),
            vmem_limit_bytes=vmem_limit,
        ),
        cost_estimate=cost,
    )(x2, w2, b2, r2, g2, be2)

    return out2.reshape(B, S, H)


def _reference(hidden_states, input_tensor, w, b, gamma, beta, eps=1e-12):
    h = hidden_states @ w + b
    h = h + input_tensor
    mean = jnp.mean(h, axis=-1, keepdims=True)
    var = jnp.mean((h - mean) ** 2, axis=-1, keepdims=True)
    return (h - mean) / jnp.sqrt(var + eps) * gamma + beta


if __name__ == "__main__":
    # toy config: intermediate_size=128, hidden_size=32, layer_norm_eps=1e-12
    B, S = 2, 8
    INTERMEDIATE, HIDDEN = 128, 32
    EPS = 1e-12

    key = jax.random.PRNGKey(0)
    k1, k2, k3, k4, k5, k6 = jax.random.split(key, 6)

    hidden_states = jax.random.normal(k1, (B, S, INTERMEDIATE), jnp.float32)
    input_tensor = jax.random.normal(k2, (B, S, HIDDEN), jnp.float32)

    # nn.Linear(intermediate_size, hidden_size): weight [H, I], bias [H].
    # The kernel takes the transposed weight [I, H].
    w_t = jax.random.normal(k3, (INTERMEDIATE, HIDDEN), jnp.float32) * 0.02
    b = jax.random.normal(k4, (HIDDEN,), jnp.float32) * 0.02
    gamma = 1.0 + 0.1 * jax.random.normal(k5, (HIDDEN,), jnp.float32)
    beta = 0.1 * jax.random.normal(k6, (HIDDEN,), jnp.float32)

    ref = _reference(hidden_states, input_tensor, w_t, b, gamma, beta, eps=EPS)

    # Default path: bf16 MXU operands + f32 accumulation / f32 LayerNorm.
    out = jax.block_until_ready(
        bert_output(hidden_states, input_tensor, w_t, b, gamma, beta, eps=EPS))
    assert out.shape == (B, S, HIDDEN)
    assert jnp.allclose(out, ref, atol=3e-2, rtol=3e-2), "bf16 mismatch vs reference"

    # Forced full-precision MXU operands — tight tolerance check.
    out_f32 = jax.block_until_ready(
        bert_output(hidden_states, input_tensor, w_t, b, gamma, beta, eps=EPS,
                    matmul_dtype=jnp.float32))
    assert out_f32.shape == (B, S, HIDDEN)
    assert jnp.allclose(out_f32, ref, atol=1e-4, rtol=1e-4), "f32 mismatch vs reference"

    print("KERNEL_OK")
</pallas_src>

<mosaic_0001>
module attributes {stable_mosaic.version = 11 : i64} {
  func.func @_bert_output_kernel(%arg0: i32, %arg1: memref<8x128xf32, #tpu.memory_space<vmem>>, %arg2: memref<128x32xbf16, #tpu.memory_space<vmem>>, %arg3: memref<1x32xf32, #tpu.memory_space<vmem>>, %arg4: memref<8x32xf32, #tpu.memory_space<vmem>>, %arg5: memref<1x32xf32, #tpu.memory_space<vmem>>, %arg6: memref<1x32xf32, #tpu.memory_space<vmem>>, %arg7: memref<8x32xf32, #tpu.memory_space<vmem>>) attributes {dimension_semantics = [#tpu.dimension_semantics<parallel>], iteration_bounds = array<i64: 2>, scalar_prefetch = 0 : i64, scratch_operands = 0 : i64, tpu.core_type = #tpu.core_type<tc>, window_params = [{transform_indices = @transform_0, window_bounds = array<i64: 8, 128>}, {pipeline_mode = #tpu.pipeline_mode<synchronous>, transform_indices = @transform_1, window_bounds = array<i64: 128, 32>}, {pipeline_mode = #tpu.pipeline_mode<synchronous>, transform_indices = @transform_2, window_bounds = array<i64: 1, 32>}, {transform_indices = @transform_3, window_bounds = array<i64: 8, 32>}, {pipeline_mode = #tpu.pipeline_mode<synchronous>, transform_indices = @transform_4, window_bounds = array<i64: 1, 32>}, {pipeline_mode = #tpu.pipeline_mode<synchronous>, transform_indices = @transform_5, window_bounds = array<i64: 1, 32>}, {transform_indices = @transform_6, window_bounds = array<i64: 8, 32>}]} {
    %c0 = arith.constant 0 : index
    %c0_0 = arith.constant 0 : index
    %0 = vector.load %arg1[%c0, %c0_0] : memref<8x128xf32, #tpu.memory_space<vmem>>, vector<8x128xf32>
    %1 = arith.truncf %0 : vector<8x128xf32> to vector<8x128xbf16>
    %c0_1 = arith.constant 0 : index
    %c0_2 = arith.constant 0 : index
    %2 = vector.load %arg2[%c0_1, %c0_2] : memref<128x32xbf16, #tpu.memory_space<vmem>>, vector<128x32xbf16>
    %cst = arith.constant dense<0.000000e+00> : vector<8x32xf32>
    %3 = tpu.matmul %1, %2, %cst {dimension_numbers = #tpu.dot_dimension_numbers<[1], [0], [0], [1], [0, 0, 1, 1], [], []>} : vector<8x128xbf16>, vector<128x32xbf16>, vector<8x32xf32> -> vector<8x32xf32>
    %c0_3 = arith.constant 0 : index
    %c0_4 = arith.constant 0 : index
    %4 = vector.load %arg3[%c0_3, %c0_4] : memref<1x32xf32, #tpu.memory_space<vmem>>, vector<1x32xf32>
    %c0_5 = arith.constant 0 : index
    %c0_6 = arith.constant 0 : index
    %5 = vector.load %arg5[%c0_5, %c0_6] : memref<1x32xf32, #tpu.memory_space<vmem>>, vector<1x32xf32>
    %c0_7 = arith.constant 0 : index
    %c0_8 = arith.constant 0 : index
    %6 = vector.load %arg6[%c0_7, %c0_8] : memref<1x32xf32, #tpu.memory_space<vmem>>, vector<1x32xf32>
    %7 = vector.broadcast %4 : vector<1x32xf32> to vector<8x32xf32>
    %8 = arith.addf %3, %7 : vector<8x32xf32>
    %c0_9 = arith.constant 0 : index
    %c0_10 = arith.constant 0 : index
    %9 = vector.load %arg4[%c0_9, %c0_10] : memref<8x32xf32, #tpu.memory_space<vmem>>, vector<8x32xf32>
    %10 = arith.addf %8, %9 : vector<8x32xf32>
    %cst_11 = arith.constant dense<0.000000e+00> : vector<8xf32>
    %11 = vector.multi_reduction <add>, %10, %cst_11 [1] : vector<8x32xf32> to vector<8xf32>
    %12 = vector.shape_cast %11 : vector<8xf32> to vector<8x1xf32>
    %cst_12 = arith.constant 3.200000e+01 : f32
    %13 = vector.broadcast %cst_12 : f32 to vector<8x1xf32>
    %14 = arith.divf %12, %13 : vector<8x1xf32>
    %15 = vector.broadcast %14 : vector<8x1xf32> to vector<8x32xf32>
    %16 = arith.subf %10, %15 : vector<8x32xf32>
    %17 = arith.mulf %16, %16 : vector<8x32xf32>
    %cst_13 = arith.constant dense<0.000000e+00> : vector<8xf32>
    %18 = vector.multi_reduction <add>, %17, %cst_13 [1] : vector<8x32xf32> to vector<8xf32>
    %19 = vector.shape_cast %18 : vector<8xf32> to vector<8x1xf32>
    %cst_14 = arith.constant 3.200000e+01 : f32
    %20 = vector.broadcast %cst_14 : f32 to vector<8x1xf32>
    %21 = arith.divf %19, %20 : vector<8x1xf32>
    %cst_15 = arith.constant 9.99999996E-13 : f32
    %22 = vector.broadcast %cst_15 : f32 to vector<8x1xf32>
    %23 = arith.addf %21, %22 : vector<8x1xf32>
    %24 = math.rsqrt %23 : vector<8x1xf32>
    %25 = vector.broadcast %24 : vector<8x1xf32> to vector<8x32xf32>
    %26 = arith.mulf %16, %25 : vector<8x32xf32>
    %27 = vector.broadcast %5 : vector<1x32xf32> to vector<8x32xf32>
    %28 = arith.mulf %26, %27 : vector<8x32xf32>
    %29 = vector.broadcast %6 : vector<1x32xf32> to vector<8x32xf32>
    %30 = arith.addf %28, %29 : vector<8x32xf32>
    %c0_16 = arith.constant 0 : index
    %c0_17 = arith.constant 0 : index
    %31 = vector.load %arg7[%c0_16, %c0_17] : memref<8x32xf32, #tpu.memory_space<vmem>>, vector<8x32xf32>
    tpu.vector_store %arg7[%c0_16, %c0_17], %30 {strides = array<i32>} : memref<8x32xf32, #tpu.memory_space<vmem>>, vector<8x32xf32>,
    return
  }
  func.func @transform_0(%arg0: i32) -> (i32, i32) {
    %c0_i32 = arith.constant 0 : i32
    %c0_i32_0 = arith.constant 0 : i32
    return %arg0, %c0_i32 : i32, i32
  }
  func.func @transform_1(%arg0: i32) -> (i32, i32) {
    %c0_i32 = arith.constant 0 : i32
    %c0_i32_0 = arith.constant 0 : i32
    %c0_i32_1 = arith.constant 0 : i32
    return %c0_i32, %c0_i32_0 : i32, i32
  }
  func.func @transform_2(%arg0: i32) -> (i32, i32) {
    %c0_i32 = arith.constant 0 : i32
    %c0_i32_0 = arith.constant 0 : i32
    %c0_i32_1 = arith.constant 0 : i32
    return %c0_i32, %c0_i32_0 : i32, i32
  }
  func.func @transform_3(%arg0: i32) -> (i32, i32) {
    %c0_i32 = arith.constant 0 : i32
    %c0_i32_0 = arith.constant 0 : i32
    return %arg0, %c0_i32 : i32, i32
  }
  func.func @transform_4(%arg0: i32) -> (i32, i32) {
    %c0_i32 = arith.constant 0 : i32
    %c0_i32_0 = arith.constant 0 : i32
    %c0_i32_1 = arith.constant 0 : i32
    return %c0_i32, %c0_i32_0 : i32, i32
  }
  func.func @transform_5(%arg0: i32) -> (i32, i32) {
    %c0_i32 = arith.constant 0 : i32
    %c0_i32_0 = arith.constant 0 : i32
    %c0_i32_1 = arith.constant 0 : i32
    return %c0_i32, %c0_i32_0 : i32, i32
  }
  func.func @transform_6(%arg0: i32) -> (i32, i32) {
    %c0_i32 = arith.constant 0 : i32
    %c0_i32_0 = arith.constant 0 : i32
    return %arg0, %c0_i32 : i32, i32
  }
}

</mosaic_0001>

<llo_original>
// kernel: tpu_custom_call.1
$region0: #{tpu_custom_call.1}
  #allocation0 [shape = 'u32[]', space=smem, size = 0x4, offset = 0x4, fixed_abs, tag = 'smem constant byte address 0x4 - core index']
  #allocation1 [shape = 'u32[144,128]{1,0:T(1,128)}', space=vmem, size = 0x12000, scoped, tag = 'internal scratch']
  %s0 = inlined_call_operand.vmem [shape: f32[16,128], index: 0, kind: input, shape index: {}]
  %s1 = inlined_call_operand.vmem [shape: bf16[128,32], index: 1, kind: input, shape index: {}]
  %s2 = inlined_call_operand.vmem [shape: f32[1,32], index: 2, kind: input, shape index: {}]
  %s3 = inlined_call_operand.vmem [shape: f32[16,32], index: 3, kind: input, shape index: {}]
  %s4 = inlined_call_operand.vmem [shape: f32[1,32], index: 4, kind: input, shape index: {}]
  %s5 = inlined_call_operand.vmem [shape: f32[1,32], index: 5, kind: input, shape index: {}]
  %s6 = inlined_call_operand.hbm [shape: f32[16,32], index: 6, kind: output, shape index: {}]
  %s7 = sld [smem:[#allocation0]]
  $region57: #{tpu_custom_call.1} parent=0
    _
  %s9 = ssub.s32 1, %s7
  %s10 = scalar_select 0, %s9, %s7
  $region1: #{tpu_custom_call.1} parent=0
    #allocation2 [shape = 'u8[8192]{0}', space=vmem, size = 0x2000, scoped, tag = 'output window, operand 0']
    #allocation3 [shape = 's32[2]{0}', space=sflag, size = 0x8, scoped, tag = 'scoped memory for tpu_custom_call.1']
    %11 = vsyncpa [#allocation3], 0
    %s12 = scalar_lea.sflag [#allocation3], 1
    %13 = vsyncpa %s12, 0
    loop: start=0, step=1, limit=4
    $region2: #{tpu_custom_call.1} parent=1 // loop_pre_header
      _
    $region3: #{tpu_custom_call.1} parent=1 // loop_header
      %s15 = sphi 0, %s19
      %p16 = scmp.ge.s32.totalorder %s15, 4
      %s25 = sphi 0, %s27
      %s28 = sphi 0, %s25
      %s29 = sphi 0, %s28
      %s45 = sphi 0, %s29
      %s49 = sphi 0, %s49
      %s51 = sphi 0, %s49
      %s52 = sphi 0, %s51
      %s66 = sphi 0, %s52
      %s70 = sphi 0, %s70
      %s72 = sphi 0, %s70
      %s73 = sphi 0, %s72
      %s87 = sphi 0, %s73
      %s93 = sphi 0, %s95
      %s96 = sphi 0, %s93
      %s97 = sphi 0, %s96
      %s113 = sphi 0, %s97
      %s117 = sphi 0, %s117
      %s119 = sphi 0, %s117
      %s120 = sphi 0, %s119
      %s134 = sphi 0, %s120
      %s138 = sphi 0, %s138
      %s140 = sphi 0, %s138
      %s141 = sphi 0, %s140
      %s155 = sphi 0, %s141
      %s161 = sphi 0, %s163
      %s164 = sphi 0, %s161
      %s165 = sphi 0, %s164
      %s181 = sphi 0, %s165
    $region4: #{tpu_custom_call.1} parent=1 // loop_header_branch
      %18 = sbr.rel (%p16) target = $region8
    $region5: #{tpu_custom_call.1} parent=1 // loop_body
      %s20 = ssub.s32 %s15, 1
      %s21 = ssub.s32 %s15, 2
      %s22 = sadd.s32 %s15, 1
      %s23 = ssub.s32 %s15, %s22
      %p24 = scmp.eq.s32.totalorder %s23, 0
      %s26 = sadd.s32 %s25, 1
      %s27 = scalar_select %p24, %s25, %s26
      %p30 = pneg %p24
      %p31 = scmp.eq.s32.totalorder %s15, 1
      %p32 = por %p30, %p31
      %p33 = scmp.ne.s32.totalorder %s25, %s28
      %p34 = scmp.eq.s32.totalorder %s15, 0
      %p35 = por %p33, %p34
      %p36 = scmp.ne.s32.totalorder %s25, %s28
      %p37 = scmp.eq.s32.totalorder %s20, 1
      %p38 = por %p36, %p37
      %p39 = scmp.ne.s32.totalorder %s28, %s29
      %p40 = scmp.eq.s32.totalorder %s20, 0
      %p41 = por %p39, %p40
      %p42 = scmp.ne.s32.totalorder %s28, %s29
      %p43 = scmp.eq.s32.totalorder %s21, 1
      %p44 = por %p42, %p43
      %p46 = scmp.ne.s32.totalorder %s29, %s45
      %p47 = scmp.eq.s32.totalorder %s21, 0
      %p48 = por %p46, %p47
      %s50 = sadd.s32 %s49, 1
      %p53 = scmp.eq.s32.totalorder %s15, 1
      %p54 = scmp.ne.s32.totalorder %s49, %s51
      %p55 = scmp.eq.s32.totalorder %s15, 0
      %p56 = por %p54, %p55
      %p57 = scmp.ne.s32.totalorder %s49, %s51
      %p58 = scmp.eq.s32.totalorder %s20, 1
      %p59 = por %p57, %p58
      %p60 = scmp.ne.s32.totalorder %s51, %s52
      %p61 = scmp.eq.s32.totalorder %s20, 0
      %p62 = por %p60, %p61
      %p63 = scmp.ne.s32.totalorder %s51, %s52
      %p64 = scmp.eq.s32.totalorder %s21, 1
      %p65 = por %p63, %p64
      %p67 = scmp.ne.s32.totalorder %s52, %s66
      %p68 = scmp.eq.s32.totalorder %s21, 0
      %p69 = por %p67, %p68
      %s71 = sadd.s32 %s70, 1
      %p74 = scmp.eq.s32.totalorder %s15, 1
      %p75 = scmp.ne.s32.totalorder %s70, %s72
      %p76 = scmp.eq.s32.totalorder %s15, 0
      %p77 = por %p75, %p76
      %p78 = scmp.ne.s32.totalorder %s70, %s72
      %p79 = scmp.eq.s32.totalorder %s20, 1
      %p80 = por %p78, %p79
      %p81 = scmp.ne.s32.totalorder %s72, %s73
      %p82 = scmp.eq.s32.totalorder %s20, 0
      %p83 = por %p81, %p82
      %p84 = scmp.ne.s32.totalorder %s72, %s73
      %p85 = scmp.eq.s32.totalorder %s21, 1
      %p86 = por %p84, %p85
      %p88 = scmp.ne.s32.totalorder %s73, %s87
      %p89 = scmp.eq.s32.totalorder %s21, 0
      %p90 = por %p88, %p89
      %s91 = ssub.s32 %s15, %s22
      %p92 = scmp.eq.s32.totalorder %s91, 0
      %s94 = sadd.s32 %s93, 1
      %s95 = scalar_select %p92, %s93, %s94
      %p98 = pneg %p92
      %p99 = scmp.eq.s32.totalorder %s15, 1
      %p100 = por %p98, %p99
      %p101 = scmp.ne.s32.totalorder %s93, %s96
      %p102 = scmp.eq.s32.totalorder %s15, 0
      %p103 = por %p101, %p102
      %p104 = scmp.ne.s32.totalorder %s93, %s96
      %p105 = scmp.eq.s32.totalorder %s20, 1
      %p106 = por %p104, %p105
      %p107 = scmp.ne.s32.totalorder %s96, %s97
      %p108 = scmp.eq.s32.totalorder %s20, 0
      %p109 = por %p107, %p108
      %p110 = scmp.ne.s32.totalorder %s96, %s97
      %p111 = scmp.eq.s32.totalorder %s21, 1
      %p112 = por %p110, %p111
      %p114 = scmp.ne.s32.totalorder %s97, %s113
      %p115 = scmp.eq.s32.totalorder %s21, 0
      %p116 = por %p114, %p115
      %s118 = sadd.s32 %s117, 1
      %p121 = scmp.eq.s32.totalorder %s15, 1
      %p122 = scmp.ne.s32.totalorder %s117, %s119
      %p123 = scmp.eq.s32.totalorder %s15, 0
      %p124 = por %p122, %p123
      %p125 = scmp.ne.s32.totalorder %s117, %s119
      %p126 = scmp.eq.s32.totalorder %s20, 1
      %p127 = por %p125, %p126
      %p128 = scmp.ne.s32.totalorder %s119, %s120
      %p129 = scmp.eq.s32.totalorder %s20, 0
      %p130 = por %p128, %p129
      %p131 = scmp.ne.s32.totalorder %s119, %s120
      %p132 = scmp.eq.s32.totalorder %s21, 1
      %p133 = por %p131, %p132
      %p135 = scmp.ne.s32.totalorder %s120, %s134
      %p136 = scmp.eq.s32.totalorder %s21, 0
      %p137 = por %p135, %p136
      %s139 = sadd.s32 %s138, 1
      %p142 = scmp.eq.s32.totalorder %s15, 1
      %p143 = scmp.ne.s32.totalorder %s138, %s140
      %p144 = scmp.eq.s32.totalorder %s15, 0
      %p145 = por %p143, %p144
      %p146 = scmp.ne.s32.totalorder %s138, %s140
      %p147 = scmp.eq.s32.totalorder %s20, 1
      %p148 = por %p146, %p147
      %p149 = scmp.ne.s32.totalorder %s140, %s141
      %p150 = scmp.eq.s32.totalorder %s20, 0
      %p151 = por %p149, %p150
      %p152 = scmp.ne.s32.totalorder %s140, %s141
      %p153 = scmp.eq.s32.totalorder %s21, 1
      %p154 = por %p152, %p153
      %p156 = scmp.ne.s32.totalorder %s141, %s155
      %p157 = scmp.eq.s32.totalorder %s21, 0
      %p158 = por %p156, %p157
      %s159 = ssub.s32 %s15, %s22
      %p160 = scmp.eq.s32.totalorder %s159, 0
      %s162 = sadd.s32 %s161, 1
      %s163 = scalar_select %p160, %s161, %s162
      %p166 = pneg %p160
      %p167 = scmp.eq.s32.totalorder %s15, 1
      %p168 = por %p166, %p167
      %p169 = scmp.ne.s32.totalorder %s161, %s164
      %p170 = scmp.eq.s32.totalorder %s15, 0
      %p171 = por %p169, %p170
      %p172 = scmp.ne.s32.totalorder %s161, %s164
      %p173 = scmp.eq.s32.totalorder %s20, 1
      %p174 = por %p172, %p173
      %p175 = scmp.ne.s32.totalorder %s164, %s165
      %p176 = scmp.eq.s32.totalorder %s20, 0
      %p177 = por %p175, %p176
      %p178 = scmp.ne.s32.totalorder %s164, %s165
      %p179 = scmp.eq.s32.totalorder %s21, 1
      %p180 = por %p178, %p179
      %p182 = scmp.ne.s32.totalorder %s165, %s181
      %p183 = scmp.eq.s32.totalorder %s21, 0
      %p184 = por %p182, %p183
      %p185 = scmp.le.s32.totalorder 1, %s15
      %p186 = scmp.lt.s32.totalorder %s15, 3
      %p187 = pnand %p185, %p186
      %p188 = pneg %p187
      // Predicated region
      $region9: #{tpu_custom_call.1} parent=5 // pred_check
        _
      $region10: #{tpu_custom_call.1} parent=5 // pred_check_branch
        %190 = sbr.rel (%p187) target = $region12
      $region11: #{tpu_custom_call.1} parent=5 // pred_region
        %s191 = ssub.s32 %s15, 1
        // Predicated region
        $region13: #{tpu_custom_call.1} parent=11 // pred_check
          %p192 = pneg %p62
        $region14: #{tpu_custom_call.1} parent=11 // pred_check_branch
          %194 = sbr.rel (%p192) target = $region16
        $region15: #{tpu_custom_call.1} parent=11 // pred_region
          _
        $region16: #{tpu_custom_call.1} parent=11 // pred_fallthru
          _
        // Predicated region
        $region17: #{tpu_custom_call.1} parent=11 // pred_check
          %p195 = pneg %p83
        $region18: #{tpu_custom_call.1} parent=11 // pred_check_branch
          %197 = sbr.rel (%p195) target = $region20
        $region19: #{tpu_custom_call.1} parent=11 // pred_region
          _
        $region20: #{tpu_custom_call.1} parent=11 // pred_fallthru
          _
        // Predicated region
        $region21: #{tpu_custom_call.1} parent=11 // pred_check
          %p198 = pneg %p130
        $region22: #{tpu_custom_call.1} parent=11 // pred_check_branch
          %200 = sbr.rel (%p198) target = $region24
        $region23: #{tpu_custom_call.1} parent=11 // pred_region
          _
        $region24: #{tpu_custom_call.1} parent=11 // pred_fallthru
          _
        // Predicated region
        $region25: #{tpu_custom_call.1} parent=11 // pred_check
          %p201 = pneg %p151
        $region26: #{tpu_custom_call.1} parent=11 // pred_check_branch
          %203 = sbr.rel (%p201) target = $region28
        $region27: #{tpu_custom_call.1} parent=11 // pred_region
          _
        $region28: #{tpu_custom_call.1} parent=11 // pred_fallthru
          _
      $region12: #{tpu_custom_call.1} parent=5 // pred_fallthru
        _
      %p204 = scmp.lt.s32.totalorder %s15, 2
      // Predicated region
      $region29: #{tpu_custom_call.1} parent=5 // pred_check
        %p205 = pneg %p204
      $region30: #{tpu_custom_call.1} parent=5 // pred_check_branch
        %207 = sbr.rel (%p205) target = $region32
      $region31: #{tpu_custom_call.1} parent=5 // pred_region
        // Predicated region
        $region33: #{tpu_custom_call.1} parent=31 // pred_check
          %p208 = pneg %p35
        $region34: #{tpu_custom_call.1} parent=31 // pred_check_branch
          %210 = sbr.rel (%p208) target = $region36
        $region35: #{tpu_custom_call.1} parent=31 // pred_region
          %p211 = scmp.lt.s32.totalorder %s15, 1
          %s212 = scalar_select %p211, %s15, 1
          %s213 = smul.addr %s212, 8
          %s214 = scalar_lea.vmem %s0, %s213
        $region36: #{tpu_custom_call.1} parent=31 // pred_fallthru
          _
        // Predicated region
        $region37: #{tpu_custom_call.1} parent=31 // pred_check
          %p215 = pneg %p103
        $region38: #{tpu_custom_call.1} parent=31 // pred_check_branch
          %217 = sbr.rel (%p215) target = $region40
        $region39: #{tpu_custom_call.1} parent=31 // pred_region
          %p218 = scmp.lt.s32.totalorder %s15, 1
          %s219 = scalar_select %p218, %s15, 1
          %s220 = smul.addr %s219, 8
          %s221 = scalar_lea.vmem %s3, %s220
        $region40: #{tpu_custom_call.1} parent=31 // pred_fallthru
          _
      $region32: #{tpu_custom_call.1} parent=5 // pred_fallthru
        _
      %p222 = scmp.le.s32.totalorder 1, %s15
      %p223 = scmp.lt.s32.totalorder %s15, 3
      %p224 = pnand %p222, %p223
      %p225 = pneg %p224
      // Predicated region
      $region41: #{tpu_custom_call.1} parent=5 // pred_check
        _
      $region42: #{tpu_custom_call.1} parent=5 // pred_check_branch
        %227 = sbr.rel (%p224) target = $region44
      $region43: #{tpu_custom_call.1} parent=5 // pred_region
        %s228 = ssub.s32 %s15, 1
        %p229 = scmp.lt.s32.totalorder %s20, 1
        %s230 = scalar_select %p229, %s20, 1
        %s231 = smul.addr %s230, 8
        %s232 = scalar_lea.vmem %s0, %s231
        %p233 = pneg %p41
        %p234 = pneg %p38
        %p235 = pneg %p62
        %p236 = pneg %p59
        %p237 = pneg %p83
        %p238 = pneg %p80
        %p239 = scmp.lt.s32.totalorder %s20, 1
        %s240 = scalar_select %p239, %s20, 1
        %s241 = smul.addr %s240, 8
        %s242 = scalar_lea.vmem %s3, %s241
        %p243 = pneg %p109
        %p244 = pneg %p106
        %p245 = pneg %p130
        %p246 = pneg %p127
        %p247 = pneg %p151
        %p248 = pneg %p148
        %p249 = pneg %p177
        %p250 = pneg %p174
        %s251 = sand.u32 %s164, 1
        %s252 = scalar_lea.sflag [#allocation3], %s251
        %s253 = sand.u32 %s164, 1
        %s254 = smul.addr %s253, 8
        %s255 = scalar_lea.vmem [#allocation2], %s254
        %p256 = scmp.lt.s32.totalorder %s20, 1
        %s257 = scalar_select %p256, %s20, 1
        %s258 = smul.addr %s257, 8
        %s259 = scalar_lea.vmem %s0, %s258
        %p260 = scmp.lt.s32.totalorder %s20, 1
        %s261 = scalar_select %p260, %s20, 1
        %s262 = smul.addr %s261, 8
        %s263 = scalar_lea.vmem %s3, %s262
        %v265 = vld [vmem:[%s259] sm:$0xff]
        %v266 = vpack.c.bf16 %v265, %v265
        %v267 = vld [vmem:[%s1] sm:$0xf]
        %v268 = vld [vmem:[%s1 + $0x4] sm:$0xf]
        %v269 = vld [vmem:[%s1 + $0x8] sm:$0xf]
        %v270 = vld [vmem:[%s1 + $0xc] sm:$0xf]
        %v271 = vld [vmem:[%s1 + $0x10] sm:$0xf]
        %v272 = vld [vmem:[%s1 + $0x14] sm:$0xf]
        %v273 = vld [vmem:[%s1 + $0x18] sm:$0xf]
        %v274 = vld [vmem:[%s1 + $0x1c] sm:$0xf]
        %v275 = vld [vmem:[%s1 + $0x20] sm:$0xf]
        %v276 = vld [vmem:[%s1 + $0x24] sm:$0xf]
        %v277 = vld [vmem:[%s1 + $0x28] sm:$0xf]
        %v278 = vld [vmem:[%s1 + $0x2c] sm:$0xf]
        %v279 = vld [vmem:[%s1 + $0x30] sm:$0xf]
        %v280 = vld [vmem:[%s1 + $0x34] sm:$0xf]
        %v281 = vld [vmem:[%s1 + $0x38] sm:$0xf]
        %v282 = vld [vmem:[%s1 + $0x3c] sm:$0xf]
        %v283 = vld [vmem:[%s2] sm:$0x1]
        %v284 = vld [vmem:[%s4] sm:$0x1]
        %v285 = vld [vmem:[%s5] sm:$0x1]
        %v287 = vlaneseq
        %v288 = vshrl.u32 %v287, 7
        %v289 = vsub.s32 0, %v288
        %v290 = vrot.slane %v283, %v289
        %v308 = vunpack.c.l.b16 %v267
        %v309 = vunpack.c.l.b16 %v268
        %v310 = vunpack.c.l.b16 %v269
        %v311 = vunpack.c.l.b16 %v270
        %v312 = vunpack.c.l.b16 %v271
        %v313 = vunpack.c.l.b16 %v272
        %v314 = vunpack.c.l.b16 %v273
        %v315 = vunpack.c.l.b16 %v274
        %v316 = vunpack.c.l.b16 %v275
        %v317 = vunpack.c.l.b16 %v276
        %v318 = vunpack.c.l.b16 %v277
        %v319 = vunpack.c.l.b16 %v278
        %v320 = vunpack.c.l.b16 %v279
        %v321 = vunpack.c.l.b16 %v280
        %v322 = vunpack.c.l.b16 %v281
        %v323 = vunpack.c.l.b16 %v282
        %v324 = vpack.c.b16 %v309, %v308
        %v325 = vpack.c.b16 %v311, %v310
        %v326 = vpack.c.b16 %v313, %v312
        %v327 = vpack.c.b16 %v315, %v314
        %v328 = vpack.c.b16 %v317, %v316
        %v329 = vpack.c.b16 %v319, %v318
        %v330 = vpack.c.b16 %v321, %v320
        %v331 = vpack.c.b16 %v323, %v322
        %340 = vmatprep.subr.bf16.mxu0 0
        %341 = vmatpush1.bf16.msra.mxu0 %v331
        %342 = vmatprep.subr.bf16.mxu0 0
        %343 = vmatpush1.bf16.msra.mxu0 %v330
        %344 = vmatprep.subr.bf16.mxu0 0
        %345 = vmatpush1.bf16.msra.mxu0 %v329
        %346 = vmatprep.subr.bf16.mxu0 0
        %347 = vmatpush1.bf16.msra.mxu0 %v328
        %348 = vmatprep.subr.bf16.mxu0 0
        %349 = vmatpush1.bf16.msra.mxu0 %v327
        %350 = vmatprep.subr.bf16.mxu0 0
        %351 = vmatpush1.bf16.msra.mxu0 %v326
        %352 = vmatprep.subr.bf16.mxu0 0
        %353 = vmatpush1.bf16.msra.mxu0 %v325
        %354 = vmatprep.subr.bf16.mxu0 0
        %355 = vmatpush1.bf16.msra.mxu0 %v324
        %356 = vmatprep.subr.bf16.mxu0 0
        %357 = vmatpush2.bf16.msra.mxu0 0
        %358 = vmatprep.subr.bf16.mxu0 0
        %359 = vmatpush2.bf16.msra.mxu0 0
        %360 = vmatprep.subr.bf16.mxu0 0
        %361 = vmatpush2.bf16.msra.mxu0 0
        %362 = vmatprep.subr.bf16.mxu0 0
        %363 = vmatpush2.bf16.msra.mxu0 0
        %364 = vmatprep.subr.bf16.mxu0 0
        %365 = vmatpush2.bf16.msra.mxu0 0
        %366 = vmatprep.subr.bf16.mxu0 0
        %367 = vmatpush2.bf16.msra.mxu0 0
        %368 = vmatprep.subr.bf16.mxu0 0
        %369 = vmatpush2.bf16.msra.mxu0 0
        %370 = vmatprep.subr.bf16.mxu0 0
        %371 = vmatpush2.bf16.msra.mxu0 0
        %372 = vmatprep.mubr.bf16.mxu0 0
        %373 = vmatmul.mubr.bf16.gmra.mxu0 %v266
        %v374 = vpop.f32.mrf.mxu0
        %v375 = vadd.f32 %v290, %v374
        %v376 = vpop.f32.mrf.mxu0
        %v377 = vpop.f32.mrf.mxu0
        %v378 = vpop.f32.mrf.mxu0
        %379 = vdwg.mxu0
        %v380 = vld [vmem:[%s263] sm:$0xff]
        %v381 = vadd.f32 %v375, %v380
        %vm382 = vcmask 261120
        %v383 = vsel %vm382, %v381, 0.0
        %384 = vadd.xlane.f32.xlu0 %v383
        %v385 = vpop.xlane.xlu0 %384
        %v386 = vrcp.pop 32.0
        %v387 = vmul.f32 %v385, %v386
        %v388 = vsub.f32 %v381, %v387
        %v389 = vmul.f32 %v388, %v388
        %v390 = vsel %vm382, %v389, 0.0
        %391 = vadd.xlane.f32.xlu0 %v390
        %v392 = vpop.xlane.xlu0 %391
        %v393 = vmul.f32 %v392, %v386
        %v394 = vadd.f32 %v393, 1e-12
        %v395 = vrsqrt.pop %v394
        %v396 = vmul.f32 %v388, %v395
        %v398 = vlaneseq
        %v399 = vshrl.u32 %v398, 7
        %v400 = vsub.s32 0, %v399
        %v401 = vrot.slane %v284, %v400
        %v403 = vmul.f32 %v396, %v401
        %v405 = vlaneseq
        %v406 = vshrl.u32 %v405, 7
        %v407 = vsub.s32 0, %v406
        %v408 = vrot.slane %v285, %v407
        %v410 = vadd.f32 %v403, %v408
        %411 = vst.msk [vmem:[%s255] sm:$0xff] %vm382, %v410
        %s412 = sand.u32 %s164, 1
        %s413 = scalar_lea.sflag [#allocation3], %s412
        %s414 = sand.u32 %s164, 1
        %s415 = smul.addr %s414, 8
        %s416 = scalar_lea.vmem [#allocation2], %s415
        // Predicated region
        $region45: #{tpu_custom_call.1} parent=43 // pred_check
          %p417 = pneg %p174
        $region46: #{tpu_custom_call.1} parent=43 // pred_check_branch
          %419 = sbr.rel (%p417) target = $region48
        $region47: #{tpu_custom_call.1} parent=43 // pred_region
          %s421 = ssub.s32 128, 128
          %422 = vsyncadd %s413, %s421
          %s423 = smul.addr %s20, 128
          %s424 = scalar_lea.hbm %s6, %s423
          %s426 = sshll.u32 %s416, 4
          %s427 = int_to_ptr.vmem [resolvable:$true] %s426
          %429 = dma.vmem_to_hbm [thread:$0]  %s427, 128, %s424, %s413
        $region48: #{tpu_custom_call.1} parent=43 // pred_fallthru
          _
      $region44: #{tpu_custom_call.1} parent=5 // pred_fallthru
        _
      %p430 = scmp.le.s32.totalorder 2, %s15
      // Predicated region
      $region49: #{tpu_custom_call.1} parent=5 // pred_check
        %p431 = pneg %p430
      $region50: #{tpu_custom_call.1} parent=5 // pred_check_branch
        %433 = sbr.rel (%p431) target = $region52
      $region51: #{tpu_custom_call.1} parent=5 // pred_region
        %s434 = ssub.s32 %s15, 2
        // Predicated region
        $region53: #{tpu_custom_call.1} parent=51 // pred_check
          %p435 = pneg %p180
        $region54: #{tpu_custom_call.1} parent=51 // pred_check_branch
          %437 = sbr.rel (%p435) target = $region56
        $region55: #{tpu_custom_call.1} parent=51 // pred_region
          %s438 = sand.u32 %s165, 1
          %s439 = scalar_lea.sflag [#allocation3], %s438
          %s440 = sand.u32 %s165, 1
          %s441 = smul.addr %s440, 8
          %s442 = scalar_lea.vmem [#allocation2], %s441
          %443 = dma.done %s439, 128
        $region56: #{tpu_custom_call.1} parent=51 // pred_fallthru
          _
      $region52: #{tpu_custom_call.1} parent=5 // pred_fallthru
        _
    $region6: #{tpu_custom_call.1} parent=1 // loop_footer
      %s19 = sadd.s32 1, %s15
    $region7: #{tpu_custom_call.1} parent=1 // loop_footer_branch
      %14 = sbr.rel target = $region3
    $region8: #{tpu_custom_call.1} parent=1 // loop_exit
      _
    %444 = vsyncpa [#allocation3], 1
    %s445 = scalar_lea.sflag [#allocation3], 1
    %446 = vsyncpa %s445, 1

</llo_original>
